<compile_context>
chip_gen: v7x
topology: tpu7x:2x2x1
jax: 0.10.0
libtpu: 0.0.40
codegen_flags: <defaults>
</compile_context>

<pallas_src>
import jax
import jax.numpy as jnp
from jax.experimental import pallas as pl
from jax.experimental.pallas import tpu as pltpu


def mlp_kernel(x_ref, w1_ref, b1_ref, w2_ref, b2_ref, w3_ref, b3_ref, o_ref):
    x = x_ref[...]                                              # (1, Bt)
    # Layer 1: Linear(1, 100). K=1 contraction == rank-1 outer product -> VPU.
    h1 = jax.nn.sigmoid(w1_ref[...] * x + b1_ref[...])          # (100, Bt)
    # Layer 2: Linear(100, 10). The only real matmul -> MXU, f32 accumulate.
    h2 = jnp.dot(w2_ref[...], h1, preferred_element_type=jnp.float32)  # (10, Bt)
    h2 = jax.nn.sigmoid(h2 + b2_ref[...])
    # Layer 3: Linear(10, 1). N=1 contraction -> VPU multiply + XLU reduce.
    out = jnp.sum(w3_ref[...] * h2, axis=0, keepdims=True) + b3_ref[...]  # (1, Bt)
    o_ref[...] = out.astype(o_ref.dtype)


def net_forward(x, params, *, batch_tile=512):
    """x: (B, 1) float32 -> (B, 1) float32 (same semantics as the PyTorch Net)."""
    w1, b1, w2, b2, w3, b3 = params
    B = x.shape[0]

    LANE = 128
    # Lane-dense batch tile: multiple of 128, at most `batch_tile`, and it
    # evenly divides the padded batch.
    b_round = ((B + LANE - 1) // LANE) * LANE
    tile = max(LANE, (min(batch_tile, b_round) // LANE) * LANE)
    B_pad = ((B + tile - 1) // tile) * tile
    grid = (B_pad // tile,)

    # Layout plumbing (not compute hoisting): batch goes on the lane dim.
    x_t = jnp.pad(x.T, ((0, 0), (0, B_pad - B)))   # (1, B_pad)
    w1_c = w1.T                                    # (100, 1)
    b1_c = b1.T                                    # (100, 1)
    w2_t = w2.T                                    # (10, 100)
    b2_c = b2.T                                    # (10, 1)
    w3_c = w3                                      # (10, 1)
    b3_c = b3                                      # (1, 1)

    # Weights/biases: full-array blocks with a constant block index so they
    # are loaded once and stay resident in VMEM across all grid steps.
    const = lambda a: pl.BlockSpec(a.shape, lambda i: (0,) * a.ndim)

    out_t = pl.pallas_call(
        mlp_kernel,
        out_shape=jax.ShapeDtypeStruct((1, B_pad), jnp.float32),
        grid_spec=pltpu.PrefetchScalarGridSpec(
            num_scalar_prefetch=0,
            grid=grid,
            in_specs=[pl.BlockSpec((1, tile), lambda i: (0, i)),
                      const(w1_c), const(b1_c),
                      const(w2_t), const(b2_c),
                      const(w3_c), const(b3_c)],
            out_specs=pl.BlockSpec((1, tile), lambda i: (0, i)),
        ),
        compiler_params=pltpu.CompilerParams(
            dimension_semantics=("parallel",)),
    )(x_t, w1_c, b1_c, w2_t, b2_c, w3_c, b3_c)

    return out_t[:, :B].T                          # (B, 1)


def init_params(key):
    # Mirrors nn.Linear init shapes: Linear(1,100), Linear(100,10), Linear(10,1).
    # Weights stored as (in_features, out_features); biases as (1, out_features).
    def linear(key, fan_in, fan_out):
        kw, kb = jax.random.split(key)
        bound = 1.0 / jnp.sqrt(fan_in)
        w = jax.random.uniform(kw, (fan_in, fan_out), jnp.float32, -bound, bound)
        b = jax.random.uniform(kb, (1, fan_out), jnp.float32, -bound, bound)
        return w, b

    k1, k2, k3 = jax.random.split(key, 3)
    w1, b1 = linear(k1, 1, 100)
    w2, b2 = linear(k2, 100, 10)
    w3, b3 = linear(k3, 10, 1)
    return (w1, b1, w2, b2, w3, b3)


def reference_forward(x, params):
    w1, b1, w2, b2, w3, b3 = params
    # Layers 1 and 3 are K=1 / N=1 contractions; written elementwise they are
    # mathematically identical to the matmul form (exact in f32).
    h1 = jax.nn.sigmoid(x * w1[0][None, :] + b1)                       # (B, 100)
    h2 = jax.nn.sigmoid(h1 @ w2 + b2)                                  # (B, 10)
    return jnp.sum(h2 * w3[:, 0][None, :], axis=-1, keepdims=True) + b3  # (B, 1)


if __name__ == "__main__":
    key = jax.random.PRNGKey(0)
    k_params, k_x = jax.random.split(key)
    params = init_params(k_params)
    x = jax.random.normal(k_x, (8, 1), jnp.float32)

    out = jax.block_until_ready(net_forward(x, params))
    ref = reference_forward(x, params)

    assert out.shape == (8, 1), out.shape
    assert jnp.allclose(out, ref, atol=1e-4, rtol=1e-4), (out, ref)
    print("KERNEL_OK")
</pallas_src>

<mosaic_0001>
module attributes {stable_mosaic.version = 11 : i64} {
  func.func @mlp_kernel(%arg0: i32, %arg1: memref<1x128xf32, #tpu.memory_space<vmem>>, %arg2: memref<100x1xf32, #tpu.memory_space<vmem>>, %arg3: memref<100x1xf32, #tpu.memory_space<vmem>>, %arg4: memref<10x100xf32, #tpu.memory_space<vmem>>, %arg5: memref<10x1xf32, #tpu.memory_space<vmem>>, %arg6: memref<10x1xf32, #tpu.memory_space<vmem>>, %arg7: memref<1x1xf32, #tpu.memory_space<vmem>>, %arg8: memref<1x128xf32, #tpu.memory_space<vmem>>) attributes {dimension_semantics = [#tpu.dimension_semantics<parallel>], iteration_bounds = array<i64: 1>, scalar_prefetch = 0 : i64, scratch_operands = 0 : i64, tpu.core_type = #tpu.core_type<tc>, window_params = [{transform_indices = @transform_0, window_bounds = array<i64: 1, 128>}, {pipeline_mode = #tpu.pipeline_mode<synchronous>, transform_indices = @transform_1, window_bounds = array<i64: 100, 1>}, {pipeline_mode = #tpu.pipeline_mode<synchronous>, transform_indices = @transform_2, window_bounds = array<i64: 100, 1>}, {pipeline_mode = #tpu.pipeline_mode<synchronous>, transform_indices = @transform_3, window_bounds = array<i64: 10, 100>}, {pipeline_mode = #tpu.pipeline_mode<synchronous>, transform_indices = @transform_4, window_bounds = array<i64: 10, 1>}, {pipeline_mode = #tpu.pipeline_mode<synchronous>, transform_indices = @transform_5, window_bounds = array<i64: 10, 1>}, {pipeline_mode = #tpu.pipeline_mode<synchronous>, transform_indices = @transform_6, window_bounds = array<i64: 1, 1>}, {transform_indices = @transform_7, window_bounds = array<i64: 1, 128>}]} {
    %c0 = arith.constant 0 : index
    %c0_0 = arith.constant 0 : index
    %0 = vector.load %arg1[%c0, %c0_0] : memref<1x128xf32, #tpu.memory_space<vmem>>, vector<1x128xf32>
    %c0_1 = arith.constant 0 : index
    %c0_2 = arith.constant 0 : index
    %1 = vector.load %arg2[%c0_1, %c0_2] : memref<100x1xf32, #tpu.memory_space<vmem>>, vector<100x1xf32>
    %2 = vector.broadcast %1 : vector<100x1xf32> to vector<100x128xf32>
    %3 = vector.broadcast %0 : vector<1x128xf32> to vector<100x128xf32>
    %4 = arith.mulf %2, %3 : vector<100x128xf32>
    %c0_3 = arith.constant 0 : index
    %c0_4 = arith.constant 0 : index
    %5 = vector.load %arg3[%c0_3, %c0_4] : memref<100x1xf32, #tpu.memory_space<vmem>>, vector<100x1xf32>
    %6 = vector.broadcast %5 : vector<100x1xf32> to vector<100x128xf32>
    %7 = arith.addf %4, %6 : vector<100x128xf32>
    %8 = arith.negf %7 : vector<100x128xf32>
    %9 = math.exp %8 : vector<100x128xf32>
    %cst = arith.constant 1.000000e+00 : f32
    %10 = vector.broadcast %cst : f32 to vector<100x128xf32>
    %11 = arith.addf %10, %9 : vector<100x128xf32>
    %12 = arith.divf %10, %11 : vector<100x128xf32>
    %c0_5 = arith.constant 0 : index
    %c0_6 = arith.constant 0 : index
    %13 = vector.load %arg4[%c0_5, %c0_6] : memref<10x100xf32, #tpu.memory_space<vmem>>, vector<10x100xf32>
    %cst_7 = arith.constant dense<0.000000e+00> : vector<10x128xf32>
    %14 = tpu.matmul %13, %12, %cst_7 {dimension_numbers = #tpu.dot_dimension_numbers<[1], [0], [0], [1], [0, 0, 1, 1], [], []>} : vector<10x100xf32>, vector<100x128xf32>, vector<10x128xf32> -> vector<10x128xf32>
    %c0_8 = arith.constant 0 : index
    %c0_9 = arith.constant 0 : index
    %15 = vector.load %arg5[%c0_8, %c0_9] : memref<10x1xf32, #tpu.memory_space<vmem>>, vector<10x1xf32>
    %16 = vector.broadcast %15 : vector<10x1xf32> to vector<10x128xf32>
    %17 = arith.addf %14, %16 : vector<10x128xf32>
    %18 = arith.negf %17 : vector<10x128xf32>
    %19 = math.exp %18 : vector<10x128xf32>
    %cst_10 = arith.constant 1.000000e+00 : f32
    %20 = vector.broadcast %cst_10 : f32 to vector<10x128xf32>
    %21 = arith.addf %20, %19 : vector<10x128xf32>
    %22 = arith.divf %20, %21 : vector<10x128xf32>
    %c0_11 = arith.constant 0 : index
    %c0_12 = arith.constant 0 : index
    %23 = vector.load %arg6[%c0_11, %c0_12] : memref<10x1xf32, #tpu.memory_space<vmem>>, vector<10x1xf32>
    %24 = vector.broadcast %23 : vector<10x1xf32> to vector<10x128xf32>
    %25 = arith.mulf %24, %22 : vector<10x128xf32>
    %cst_13 = arith.constant dense<0.000000e+00> : vector<128xf32>
    %26 = vector.multi_reduction <add>, %25, %cst_13 [0] : vector<10x128xf32> to vector<128xf32>
    %27 = vector.shape_cast %26 : vector<128xf32> to vector<1x128xf32>
    %c0_14 = arith.constant 0 : index
    %c0_15 = arith.constant 0 : index
    %28 = vector.load %arg7[%c0_14, %c0_15] : memref<1x1xf32, #tpu.memory_space<vmem>>, vector<1x1xf32>
    %29 = vector.broadcast %28 : vector<1x1xf32> to vector<1x128xf32>
    %30 = arith.addf %27, %29 : vector<1x128xf32>
    %c0_16 = arith.constant 0 : index
    %c0_17 = arith.constant 0 : index
    %31 = vector.load %arg8[%c0_16, %c0_17] : memref<1x128xf32, #tpu.memory_space<vmem>>, vector<1x128xf32>
    tpu.vector_store %arg8[%c0_16, %c0_17], %30 {strides = array<i32>} : memref<1x128xf32, #tpu.memory_space<vmem>>, vector<1x128xf32>,
    return
  }
  func.func @transform_0(%arg0: i32) -> (i32, i32) {
    %c0_i32 = arith.constant 0 : i32
    %c0_i32_0 = arith.constant 0 : i32
    return %c0_i32, %arg0 : i32, i32
  }
  func.func @transform_1(%arg0: i32) -> (i32, i32) {
    %c0_i32 = arith.constant 0 : i32
    %c0_i32_0 = arith.constant 0 : i32
    %c0_i32_1 = arith.constant 0 : i32
    return %c0_i32, %c0_i32_0 : i32, i32
  }
  func.func @transform_2(%arg0: i32) -> (i32, i32) {
    %c0_i32 = arith.constant 0 : i32
    %c0_i32_0 = arith.constant 0 : i32
    %c0_i32_1 = arith.constant 0 : i32
    return %c0_i32, %c0_i32_0 : i32, i32
  }
  func.func @transform_3(%arg0: i32) -> (i32, i32) {
    %c0_i32 = arith.constant 0 : i32
    %c0_i32_0 = arith.constant 0 : i32
    %c0_i32_1 = arith.constant 0 : i32
    return %c0_i32, %c0_i32_0 : i32, i32
  }
  func.func @transform_4(%arg0: i32) -> (i32, i32) {
    %c0_i32 = arith.constant 0 : i32
    %c0_i32_0 = arith.constant 0 : i32
    %c0_i32_1 = arith.constant 0 : i32
    return %c0_i32, %c0_i32_0 : i32, i32
  }
  func.func @transform_5(%arg0: i32) -> (i32, i32) {
    %c0_i32 = arith.constant 0 : i32
    %c0_i32_0 = arith.constant 0 : i32
    %c0_i32_1 = arith.constant 0 : i32
    return %c0_i32, %c0_i32_0 : i32, i32
  }
  func.func @transform_6(%arg0: i32) -> (i32, i32) {
    %c0_i32 = arith.constant 0 : i32
    %c0_i32_0 = arith.constant 0 : i32
    %c0_i32_1 = arith.constant 0 : i32
    return %c0_i32, %c0_i32_0 : i32, i32
  }
  func.func @transform_7(%arg0: i32) -> (i32, i32) {
    %c0_i32 = arith.constant 0 : i32
    %c0_i32_0 = arith.constant 0 : i32
    return %c0_i32, %arg0 : i32, i32
  }
}

</mosaic_0001>

<llo_original>
// kernel: tpu_custom_call.1
$region0: #{tpu_custom_call.1}
  #allocation0 [shape = 'u32[]', space=smem, size = 0x4, offset = 0x4, fixed_abs, tag = 'smem constant byte address 0x4 - core index']
  #allocation1 [shape = 'u32[144,128]{1,0:T(1,128)}', space=vmem, size = 0x12000, scoped, tag = 'internal scratch']
  #allocation2 [shape = 'f32[1,1]{1,0:T(1,128)S(1)}', space=vmem, size = 0x200, scoped, tag = 'scoped memory for tpu_custom_call.1']
  %s0 = inlined_call_operand.vmem [shape: f32[1,128], index: 0, kind: input, shape index: {}]
  %s1 = inlined_call_operand.vmem [shape: f32[100,1], index: 1, kind: input, shape index: {}]
  %s2 = inlined_call_operand.vmem [shape: f32[100,1], index: 2, kind: input, shape index: {}]
  %s3 = inlined_call_operand.vmem [shape: f32[10,100], index: 3, kind: input, shape index: {}]
  %s4 = inlined_call_operand.vmem [shape: f32[10,1], index: 4, kind: input, shape index: {}]
  %s5 = inlined_call_operand.vmem [shape: f32[10,1], index: 5, kind: input, shape index: {}]
  %s6 = inlined_call_operand.<no memory space> [shape: f32[1,1], index: 6, kind: input, shape index: {}]
  %s7 = inlined_call_operand.hbm [shape: f32[1,128], index: 7, kind: output, shape index: {}]
  %s8 = sld [smem:[#allocation0]]
  $region38: #{tpu_custom_call.1} parent=0
    _
  %s10 = ssub.s32 1, %s8
  %s11 = scalar_select 0, %s10, %s8
  %v12 = vstv %s6
  %13 = vst [vmem:[#allocation2] sm:$0x1] %v12
  $region1: #{tpu_custom_call.1} parent=0
    #allocation3 [shape = 'u8[512]{0}', space=vmem, size = 0x400, scoped, tag = 'output window, operand 0, single buffered']
    #allocation4 [shape = 's32[1]{0}', space=sflag, size = 0x4, scoped, tag = 'scoped memory for tpu_custom_call.1']
    %14 = vsyncpa [#allocation4], 0
    // Predicated region
    $region2: #{tpu_custom_call.1} parent=1 // pred_check
      _
    $region3: #{tpu_custom_call.1} parent=1 // pred_check_branch
      %16 = sbr.rel (0) target = $region5
    $region4: #{tpu_custom_call.1} parent=1 // pred_region
      _
    $region5: #{tpu_custom_call.1} parent=1 // pred_fallthru
      _
    // Predicated region
    $region6: #{tpu_custom_call.1} parent=1 // pred_check
      _
    $region7: #{tpu_custom_call.1} parent=1 // pred_check_branch
      %18 = sbr.rel (0) target = $region9
    $region8: #{tpu_custom_call.1} parent=1 // pred_region
      _
    $region9: #{tpu_custom_call.1} parent=1 // pred_fallthru
      _
    // Predicated region
    $region10: #{tpu_custom_call.1} parent=1 // pred_check
      _
    $region11: #{tpu_custom_call.1} parent=1 // pred_check_branch
      %20 = sbr.rel (0) target = $region13
    $region12: #{tpu_custom_call.1} parent=1 // pred_region
      _
    $region13: #{tpu_custom_call.1} parent=1 // pred_fallthru
      _
    // Predicated region
    $region14: #{tpu_custom_call.1} parent=1 // pred_check
      _
    $region15: #{tpu_custom_call.1} parent=1 // pred_check_branch
      %22 = sbr.rel (0) target = $region17
    $region16: #{tpu_custom_call.1} parent=1 // pred_region
      _
    $region17: #{tpu_custom_call.1} parent=1 // pred_fallthru
      _
    // Predicated region
    $region18: #{tpu_custom_call.1} parent=1 // pred_check
      _
    $region19: #{tpu_custom_call.1} parent=1 // pred_check_branch
      %24 = sbr.rel (0) target = $region21
    $region20: #{tpu_custom_call.1} parent=1 // pred_region
      _
    $region21: #{tpu_custom_call.1} parent=1 // pred_fallthru
      _
    // Predicated region
    $region22: #{tpu_custom_call.1} parent=1 // pred_check
      _
    $region23: #{tpu_custom_call.1} parent=1 // pred_check_branch
      %26 = sbr.rel (0) target = $region25
    $region24: #{tpu_custom_call.1} parent=1 // pred_region
      _
    $region25: #{tpu_custom_call.1} parent=1 // pred_fallthru
      _
    // Predicated region
    $region26: #{tpu_custom_call.1} parent=1 // pred_check
      _
    $region27: #{tpu_custom_call.1} parent=1 // pred_check_branch
      %28 = sbr.rel (0) target = $region29
    $region28: #{tpu_custom_call.1} parent=1 // pred_region
      _
    $region29: #{tpu_custom_call.1} parent=1 // pred_fallthru
      _
    %v29 = vld [vmem:[%s0] sm:$0x1]
    %v30 = vld [vmem:[%s1] sm:$0xff]
    %v31 = vld [vmem:[%s1 + $0x8] sm:$0xff]
    %v32 = vld [vmem:[%s1 + $0x10] sm:$0xff]
    %v33 = vld [vmem:[%s1 + $0x18] sm:$0xff]
    %v34 = vld [vmem:[%s1 + $0x20] sm:$0xff]
    %v35 = vld [vmem:[%s1 + $0x28] sm:$0xff]
    %v36 = vld [vmem:[%s1 + $0x30] sm:$0xff]
    %v37 = vld [vmem:[%s1 + $0x38] sm:$0xff]
    %v38 = vld [vmem:[%s1 + $0x40] sm:$0xff]
    %v39 = vld [vmem:[%s1 + $0x48] sm:$0xff]
    %v40 = vld [vmem:[%s1 + $0x50] sm:$0xff]
    %v41 = vld [vmem:[%s1 + $0x58] sm:$0xff]
    %v42 = vld [vmem:[%s1 + $0x60] sm:$0xf]
    %44 = vset.pattern.permute.xlu0 0
    %45 = vperm.xlu0 %44, %v30
    %v46 = vpop.permute.xlu0 %45
    %49 = vset.pattern.permute.xlu0 0
    %50 = vperm.xlu0 %49, %v31
    %v51 = vpop.permute.xlu0 %50
    %54 = vset.pattern.permute.xlu0 0
    %55 = vperm.xlu0 %54, %v32
    %v56 = vpop.permute.xlu0 %55
    %59 = vset.pattern.permute.xlu0 0
    %60 = vperm.xlu0 %59, %v33
    %v61 = vpop.permute.xlu0 %60
    %64 = vset.pattern.permute.xlu0 0
    %65 = vperm.xlu0 %64, %v34
    %v66 = vpop.permute.xlu0 %65
    %69 = vset.pattern.permute.xlu0 0
    %70 = vperm.xlu0 %69, %v35
    %v71 = vpop.permute.xlu0 %70
    %74 = vset.pattern.permute.xlu0 0
    %75 = vperm.xlu0 %74, %v36
    %v76 = vpop.permute.xlu0 %75
    %79 = vset.pattern.permute.xlu0 0
    %80 = vperm.xlu0 %79, %v37
    %v81 = vpop.permute.xlu0 %80
    %84 = vset.pattern.permute.xlu0 0
    %85 = vperm.xlu0 %84, %v38
    %v86 = vpop.permute.xlu0 %85
    %89 = vset.pattern.permute.xlu0 0
    %90 = vperm.xlu0 %89, %v39
    %v91 = vpop.permute.xlu0 %90
    %94 = vset.pattern.permute.xlu0 0
    %95 = vperm.xlu0 %94, %v40
    %v96 = vpop.permute.xlu0 %95
    %99 = vset.pattern.permute.xlu0 0
    %100 = vperm.xlu0 %99, %v41
    %v101 = vpop.permute.xlu0 %100
    %104 = vset.pattern.permute.xlu0 0
    %105 = vperm.xlu0 %104, %v42
    %v106 = vpop.permute.xlu0 %105
    %v109 = vlaneseq
    %v110 = vshrl.u32 %v109, 7
    %v111 = vsub.s32 0, %v110
    %v112 = vrot.slane %v29, %v111
    %v114 = vmul.f32 %v46, %v112
    %v115 = vmul.f32 %v51, %v112
    %v116 = vmul.f32 %v56, %v112
    %v117 = vmul.f32 %v61, %v112
    %v118 = vmul.f32 %v66, %v112
    %v119 = vmul.f32 %v71, %v112
    %v120 = vmul.f32 %v76, %v112
    %v121 = vmul.f32 %v81, %v112
    %v122 = vmul.f32 %v86, %v112
    %v123 = vmul.f32 %v91, %v112
    %v124 = vmul.f32 %v96, %v112
    %v125 = vmul.f32 %v101, %v112
    %v126 = vmul.f32 %v106, %v112
    %v127 = vld [vmem:[%s2] sm:$0xff]
    %v128 = vld [vmem:[%s2 + $0x8] sm:$0xff]
    %v129 = vld [vmem:[%s2 + $0x10] sm:$0xff]
    %v130 = vld [vmem:[%s2 + $0x18] sm:$0xff]
    %v131 = vld [vmem:[%s2 + $0x20] sm:$0xff]
    %v132 = vld [vmem:[%s2 + $0x28] sm:$0xff]
    %v133 = vld [vmem:[%s2 + $0x30] sm:$0xff]
    %v134 = vld [vmem:[%s2 + $0x38] sm:$0xff]
    %v135 = vld [vmem:[%s2 + $0x40] sm:$0xff]
    %v136 = vld [vmem:[%s2 + $0x48] sm:$0xff]
    %v137 = vld [vmem:[%s2 + $0x50] sm:$0xff]
    %v138 = vld [vmem:[%s2 + $0x58] sm:$0xff]
    %v139 = vld [vmem:[%s2 + $0x60] sm:$0xf]
    %141 = vset.pattern.permute.xlu0 0
    %142 = vperm.xlu0 %141, %v127
    %v143 = vpop.permute.xlu0 %142
    %146 = vset.pattern.permute.xlu0 0
    %147 = vperm.xlu0 %146, %v128
    %v148 = vpop.permute.xlu0 %147
    %151 = vset.pattern.permute.xlu0 0
    %152 = vperm.xlu0 %151, %v129
    %v153 = vpop.permute.xlu0 %152
    %156 = vset.pattern.permute.xlu0 0
    %157 = vperm.xlu0 %156, %v130
    %v158 = vpop.permute.xlu0 %157
    %161 = vset.pattern.permute.xlu0 0
    %162 = vperm.xlu0 %161, %v131
    %v163 = vpop.permute.xlu0 %162
    %166 = vset.pattern.permute.xlu0 0
    %167 = vperm.xlu0 %166, %v132
    %v168 = vpop.permute.xlu0 %167
    %171 = vset.pattern.permute.xlu0 0
    %172 = vperm.xlu0 %171, %v133
    %v173 = vpop.permute.xlu0 %172
    %176 = vset.pattern.permute.xlu0 0
    %177 = vperm.xlu0 %176, %v134
    %v178 = vpop.permute.xlu0 %177
    %181 = vset.pattern.permute.xlu0 0
    %182 = vperm.xlu0 %181, %v135
    %v183 = vpop.permute.xlu0 %182
    %186 = vset.pattern.permute.xlu0 0
    %187 = vperm.xlu0 %186, %v136
    %v188 = vpop.permute.xlu0 %187
    %191 = vset.pattern.permute.xlu0 0
    %192 = vperm.xlu0 %191, %v137
    %v193 = vpop.permute.xlu0 %192
    %196 = vset.pattern.permute.xlu0 0
    %197 = vperm.xlu0 %196, %v138
    %v198 = vpop.permute.xlu0 %197
    %201 = vset.pattern.permute.xlu0 0
    %202 = vperm.xlu0 %201, %v139
    %v203 = vpop.permute.xlu0 %202
    %v205 = vadd.f32 %v114, %v143
    %v206 = vadd.f32 %v115, %v148
    %v207 = vadd.f32 %v116, %v153
    %v208 = vadd.f32 %v117, %v158
    %v209 = vadd.f32 %v118, %v163
    %v210 = vadd.f32 %v119, %v168
    %v211 = vadd.f32 %v120, %v173
    %v212 = vadd.f32 %v121, %v178
    %v213 = vadd.f32 %v122, %v183
    %v214 = vadd.f32 %v123, %v188
    %v215 = vadd.f32 %v124, %v193
    %v216 = vadd.f32 %v125, %v198
    %v217 = vadd.f32 %v126, %v203
    %v218 = vxor.u32 %v205, 2147483648
    %v219 = vxor.u32 %v206, 2147483648
    %v220 = vxor.u32 %v207, 2147483648
    %v221 = vxor.u32 %v208, 2147483648
    %v222 = vxor.u32 %v209, 2147483648
    %v223 = vxor.u32 %v210, 2147483648
    %v224 = vxor.u32 %v211, 2147483648
    %v225 = vxor.u32 %v212, 2147483648
    %v226 = vxor.u32 %v213, 2147483648
    %v227 = vxor.u32 %v214, 2147483648
    %v228 = vxor.u32 %v215, 2147483648
    %v229 = vxor.u32 %v216, 2147483648
    %v230 = vxor.u32 %v217, 2147483648
    %v231 = vmul.f32 %v218, 1.442695
    %v232 = vpow.pop %v231
    %v233 = vmul.f32 %v219, 1.442695
    %v234 = vpow.pop %v233
    %v235 = vmul.f32 %v220, 1.442695
    %v236 = vpow.pop %v235
    %v237 = vmul.f32 %v221, 1.442695
    %v238 = vpow.pop %v237
    %v239 = vmul.f32 %v222, 1.442695
    %v240 = vpow.pop %v239
    %v241 = vmul.f32 %v223, 1.442695
    %v242 = vpow.pop %v241
    %v243 = vmul.f32 %v224, 1.442695
    %v244 = vpow.pop %v243
    %v245 = vmul.f32 %v225, 1.442695
    %v246 = vpow.pop %v245
    %v247 = vmul.f32 %v226, 1.442695
    %v248 = vpow.pop %v247
    %v249 = vmul.f32 %v227, 1.442695
    %v250 = vpow.pop %v249
    %v251 = vmul.f32 %v228, 1.442695
    %v252 = vpow.pop %v251
    %v253 = vmul.f32 %v229, 1.442695
    %v254 = vpow.pop %v253
    %v255 = vmul.f32 %v230, 1.442695
    %v256 = vpow.pop %v255
    %v257 = vadd.f32 %v232, 1.0
    %v258 = vadd.f32 %v234, 1.0
    %v259 = vadd.f32 %v236, 1.0
    %v260 = vadd.f32 %v238, 1.0
    %v261 = vadd.f32 %v240, 1.0
    %v262 = vadd.f32 %v242, 1.0
    %v263 = vadd.f32 %v244, 1.0
    %v264 = vadd.f32 %v246, 1.0
    %v265 = vadd.f32 %v248, 1.0
    %v266 = vadd.f32 %v250, 1.0
    %v267 = vadd.f32 %v252, 1.0
    %v268 = vadd.f32 %v254, 1.0
    %v269 = vadd.f32 %v256, 1.0
    %v270 = vrcp.pop %v257
    %v271 = vmul.f32 1.0, %v270
    %v272 = vrcp.pop %v258
    %v273 = vmul.f32 1.0, %v272
    %v274 = vrcp.pop %v259
    %v275 = vmul.f32 1.0, %v274
    %v276 = vrcp.pop %v260
    %v277 = vmul.f32 1.0, %v276
    %v278 = vrcp.pop %v261
    %v279 = vmul.f32 1.0, %v278
    %v280 = vrcp.pop %v262
    %v281 = vmul.f32 1.0, %v280
    %v282 = vrcp.pop %v263
    %v283 = vmul.f32 1.0, %v282
    %v284 = vrcp.pop %v264
    %v285 = vmul.f32 1.0, %v284
    %v286 = vrcp.pop %v265
    %v287 = vmul.f32 1.0, %v286
    %v288 = vrcp.pop %v266
    %v289 = vmul.f32 1.0, %v288
    %v290 = vrcp.pop %v267
    %v291 = vmul.f32 1.0, %v290
    %v292 = vrcp.pop %v268
    %v293 = vmul.f32 1.0, %v292
    %v294 = vrcp.pop %v269
    %v295 = vmul.f32 1.0, %v294
    %v296 = vld [vmem:[%s3] sm:$0xff]
    %v297 = vld [vmem:[%s3 + $0x8] sm:$0x3]
    %v298 = vld [vmem:[%s4] sm:$0xff]
    %v299 = vld [vmem:[%s4 + $0x8] sm:$0x3]
    %301 = vset.pattern.permute.xlu0 0
    %302 = vperm.xlu0 %301, %v298
    %v303 = vpop.permute.xlu0 %302
    %306 = vset.pattern.permute.xlu0 0
    %307 = vperm.xlu0 %306, %v299
    %v308 = vpop.permute.xlu0 %307
    %vm310 = vcmask 818176
    %v312 = vsel %vm310, %v296, 0
    %v315 = vsel %vm310, %v297, 0
    %vm317 = vcmask 1043456
    %v319 = vsel %vm317, %v295, 0
    %321 = vmatprep.subr.mxu0 0.0
    %322 = vmatpush1.msra.mxu0 %v271
    %323 = vmatprep.subr.mxu0 0.0
    %324 = vmatpush1.msra.mxu0 %v273
    %325 = vmatprep.subr.mxu0 0.0
    %326 = vmatpush1.msra.mxu0 %v275
    %327 = vmatprep.subr.mxu0 0.0
    %328 = vmatpush1.msra.mxu0 %v277
    %329 = vmatprep.subr.mxu0 0.0
    %330 = vmatpush1.msra.mxu0 %v279
    %331 = vmatprep.subr.mxu0 0.0
    %332 = vmatpush1.msra.mxu0 %v281
    %333 = vmatprep.subr.mxu0 0.0
    %334 = vmatpush1.msra.mxu0 %v283
    %335 = vmatprep.subr.mxu0 0.0
    %336 = vmatpush1.msra.mxu0 %v285
    %337 = vmatprep.subr.mxu0 0.0
    %338 = vmatpush1.msra.mxu0 %v287
    %339 = vmatprep.subr.mxu0 0.0
    %340 = vmatpush1.msra.mxu0 %v289
    %341 = vmatprep.subr.mxu0 0.0
    %342 = vmatpush1.msra.mxu0 %v291
    %343 = vmatprep.subr.mxu0 0.0
    %344 = vmatpush1.msra.mxu0 %v293
    %345 = vmatprep.subr.mxu0 0.0
    %346 = vmatpush1.msra.mxu0 %v319
    %347 = vmatprep.subr.mxu0 0.0
    %348 = vmatpush1.msra.mxu0 0.0
    %349 = vmatprep.subr.mxu0 0.0
    %350 = vmatpush1.msra.mxu0 0.0
    %351 = vmatprep.subr.mxu0 0.0
    %352 = vmatpush1.msra.mxu0 0.0
    %353 = vmatprep.subr.mxu0 0.0
    %354 = vmatpush1.msra.mxu0 0.0
    %355 = vmatprep.subr.mxu0 0.0
    %356 = vmatpush1.msra.mxu0 0.0
    %357 = vmatprep.subr.mxu0 0.0
    %358 = vmatpush1.msra.mxu0 0.0
    %359 = vmatprep.subr.mxu0 0.0
    %360 = vmatpush1.msra.mxu0 0.0
    %361 = vmatprep.subr.mxu0 0.0
    %362 = vmatpush1.msra.mxu0 0.0
    %363 = vmatprep.subr.mxu0 0.0
    %364 = vmatpush1.msra.mxu0 0.0
    %365 = vmatprep.subr.mxu0 0.0
    %366 = vmatpush1.msra.mxu0 0.0
    %367 = vmatprep.subr.mxu0 0.0
    %368 = vmatpush1.msra.mxu0 0.0
    %369 = vmatprep.subr.mxu0 0.0
    %370 = vmatpush1.msra.mxu0 0.0
    %371 = vmatprep.subr.mxu0 0.0
    %372 = vmatpush1.msra.mxu0 0.0
    %373 = vmatprep.subr.mxu0 0.0
    %374 = vmatpush1.msra.mxu0 0.0
    %375 = vmatprep.subr.mxu0 0.0
    %376 = vmatpush1.msra.mxu0 0.0
    %377 = vmatprep.subr.mxu0 0.0
    %378 = vmatpush1.msra.mxu0 0.0
    %379 = vmatprep.subr.mxu0 0.0
    %380 = vmatpush1.msra.mxu0 0.0
    %381 = vmatprep.subr.mxu0 0.0
    %382 = vmatpush1.msra.mxu0 0.0
    %383 = vmatprep.subr.mxu0 0.0
    %384 = vmatpush1.msra.mxu0 0.0
    %385 = vmatprep.mubr.f32.mxu0 0.0
    %386 = vmatmul.mubr.f32.gmra.mrb[0].mxu0 %v312
    %v387 = vpop.f32.mrb[0].mxu0
    %v388 = vadd.f32 %v303, %v387
    %v389 = vpop.f32.mrb[0].mxu0
    %390 = vmatprep.mubr.f32.mxu0 0.0
    %391 = vmatmul.mubr.f32.gmra.mrb[0].mxu0 %v315
    %v392 = vpop.f32.mrb[0].mxu0
    %v393 = vadd.f32 %v308, %v392
    %v394 = vpop.f32.mrb[0].mxu0
    %395 = vdwg.mxu0
    %v396 = vxor.u32 %v388, 2147483648
    %v397 = vxor.u32 %v393, 2147483648
    %v398 = vmul.f32 %v396, 1.442695
    %v399 = vpow.pop %v398
    %v400 = vmul.f32 %v397, 1.442695
    %v401 = vpow.pop %v400
    %v402 = vadd.f32 %v399, 1.0
    %v403 = vadd.f32 %v401, 1.0
    %v404 = vrcp.pop %v402
    %v405 = vmul.f32 1.0, %v404
    %v406 = vrcp.pop %v403
    %v407 = vmul.f32 1.0, %v406
    %v408 = vld [vmem:[%s5] sm:$0xff]
    %v409 = vld [vmem:[%s5 + $0x8] sm:$0x3]
    %411 = vset.pattern.permute.xlu0 0
    %412 = vperm.xlu0 %411, %v408
    %v413 = vpop.permute.xlu0 %412
    %416 = vset.pattern.permute.xlu0 0
    %417 = vperm.xlu0 %416, %v409
    %v418 = vpop.permute.xlu0 %417
    %v420 = vmul.f32 %v413, %v405
    %v421 = vmul.f32 %v418, %v407
    %vm422 = vcmask 1041408
    %v423 = vsel %vm422, %v421, 0.0
    %v424 = vadd.f32 %v420, %v423
    %v425 = vrot.slane %v424, 4
    %v426 = vadd.f32 %v424, %v425
    %v427 = vrot.slane %v426, 2
    %v428 = vadd.f32 %v426, %v427
    %v429 = vrot.slane %v428, 1
    %v430 = vadd.f32 %v428, %v429
    %v431 = vld [vmem:[#allocation2] sm:$0x1]
    %433 = vset.pattern.permute.xlu0 0
    %434 = vperm.xlu0 %433, %v431
    %v435 = vpop.permute.xlu0 %434
    %v437 = vlaneseq
    %v438 = vshrl.u32 %v437, 7
    %v439 = vsub.s32 0, %v438
    %v440 = vrot.slane %v435, %v439
    %v441 = vadd.f32 %v430, %v440
    %442 = vst [vmem:[#allocation3] sm:$0x1] %v441
    // Predicated region
    $region30: #{tpu_custom_call.1} parent=1 // pred_check
      _
    $region31: #{tpu_custom_call.1} parent=1 // pred_check_branch
      %444 = sbr.rel (0) target = $region33
    $region32: #{tpu_custom_call.1} parent=1 // pred_region
      %s446 = ssub.s32 16, 16
      %447 = vsyncadd [#allocation4], %s446
      %s449 = sshll.u32 [#allocation3], 4
      %s450 = int_to_ptr.vmem [resolvable:$true] %s449
      %452 = dma.vmem_to_hbm [thread:$0]  %s450, 16, %s7, [#allocation4]
    $region33: #{tpu_custom_call.1} parent=1 // pred_fallthru
      _
    // Predicated region
    $region34: #{tpu_custom_call.1} parent=1 // pred_check
      _
    $region35: #{tpu_custom_call.1} parent=1 // pred_check_branch
      %454 = sbr.rel (0) target = $region37
    $region36: #{tpu_custom_call.1} parent=1 // pred_region
      %455 = dma.done [#allocation4], 16
    $region37: #{tpu_custom_call.1} parent=1 // pred_fallthru
      _
    %456 = vsyncpa [#allocation4], 1

</llo_original>
